<compile_context>
chip_gen: v6e
topology: v6e:2x2x1
jax: 0.10.0
libtpu: 0.0.40
codegen_flags: <defaults>
</compile_context>

<pallas_src>
import jax
import jax.numpy as jnp
from jax import lax
from jax.experimental import pallas as pl
from jax.experimental.pallas import tpu as pltpu


_LANE = 128
_CHUNK_ROWS = 256        # rows per in-kernel accumulation chunk (128 KiB f32)
_MAX_TILE_ROWS = 2048    # rows per grid step (1 MiB f32 per input tile)


def _round_up(x, m):
    return ((x + m - 1) // m) * m


# ---------------------------------------------------------------------------
# Pallas kernel: per-tile raw moments for the Pearson correlation.
# ---------------------------------------------------------------------------
def _make_corr_stats_kernel(tm, chunk, rows):
    """Builds a kernel computing lane-dense partial moments for one row tile.

    tm:    rows per grid step (static), multiple of `chunk`.
    chunk: rows per accumulation chunk (static).
    rows:  true number of valid rows in the whole array (static).
    """
    nchunks = tm // chunk                # static
    need_mask = (rows % tm) != 0         # last tile reads past the array end

    def kernel(a_ref, b_ref, o_ref):
        # a_ref, b_ref: (tm, 128) tiles of the two flattened operands.
        # o_ref: (1, 8, 128) lane-dense partial-moment block owned by this
        # step; rows 0..4 = [sum a, sum b, sum a*a, sum b*b, sum a*b]
        # (sublane-axis reduction only; lanes reduced in the wrapper).
        tile_row0 = pl.program_id(0) * tm

        def body(c, carry):
            sa, sb, saa, sbb, sab = carry
            off = pl.multiple_of(c * chunk, chunk)
            a = a_ref[pl.ds(off, chunk), :].astype(jnp.float32)
            b = b_ref[pl.ds(off, chunk), :].astype(jnp.float32)
            if need_mask:
                # Mask rows beyond the true array extent (the DMA of a
                # partial last block leaves undefined data in those rows).
                rid = (tile_row0 + off
                       + lax.broadcasted_iota(jnp.int32, (chunk, _LANE), 0))
                valid = rid < rows
                a = jnp.where(valid, a, 0.0)
                b = jnp.where(valid, b, 0.0)
            sa = sa + jnp.sum(a, axis=0, keepdims=True)
            sb = sb + jnp.sum(b, axis=0, keepdims=True)
            saa = saa + jnp.sum(a * a, axis=0, keepdims=True)
            sbb = sbb + jnp.sum(b * b, axis=0, keepdims=True)
            sab = sab + jnp.sum(a * b, axis=0, keepdims=True)
            return sa, sb, saa, sbb, sab

        zero = jnp.zeros((1, _LANE), jnp.float32)
        sa, sb, saa, sbb, sab = lax.fori_loop(
            0, nchunks, body, (zero, zero, zero, zero, zero), unroll=True)

        # Output block padded to 8 sublanes; rows 5..7 stay unwritten and are
        # never read by the wrapper.
        o_ref[0, 0:1, :] = sa
        o_ref[0, 1:2, :] = sb
        o_ref[0, 2:3, :] = saa
        o_ref[0, 3:4, :] = sbb
        o_ref[0, 4:5, :] = sab

    return kernel


def _corr_raw_moments(a, b):
    """[sum_a, sum_b, sum_aa, sum_bb, sum_ab] of flat a, b via one Pallas pass."""
    assert a.shape == b.shape and a.ndim == 1
    total = a.shape[0]

    # Lane-dense (rows, 128) view. For typical feature maps B*C*H*W is a
    # multiple of 128 so this is a zero-copy reshape; only the rare
    # non-multiple case pays for a tiny zero pad (zeros leave all moments
    # unchanged -- the true element count `n` is applied by the caller).
    rem = total % _LANE
    if rem:
        a = jnp.pad(a, (0, _LANE - rem))
        b = jnp.pad(b, (0, _LANE - rem))
    rows = (total + _LANE - 1) // _LANE
    a2 = a.reshape(rows, _LANE)
    b2 = b.reshape(rows, _LANE)

    # Tile size: ~1 MiB per input tile amortizes the per-grid-step overhead,
    # stays well under v5e's 16 MiB scoped-VMEM default when double-buffered
    # (2 inputs x 2 buffers x 1 MiB = 4 MiB), and ntiles >= 2 whenever the
    # problem is big enough so v7x's two TensorCores can split the grid.
    if rows <= _CHUNK_ROWS:
        tm = _round_up(rows, 8)
        chunk = tm
    else:
        tm = min(_MAX_TILE_ROWS, _round_up((rows + 1) // 2, _CHUNK_ROWS))
        chunk = _CHUNK_ROWS
    ntiles = (rows + tm - 1) // tm

    partial = pl.pallas_call(
        _make_corr_stats_kernel(tm, chunk, rows),
        out_shape=jax.ShapeDtypeStruct((ntiles, 8, _LANE), jnp.float32),
        grid_spec=pltpu.PrefetchScalarGridSpec(
            num_scalar_prefetch=0,
            grid=(ntiles,),
            in_specs=[
                pl.BlockSpec((tm, _LANE), lambda i: (i, 0)),
                pl.BlockSpec((tm, _LANE), lambda i: (i, 0)),
            ],
            out_specs=pl.BlockSpec((1, 8, _LANE), lambda i: (i, 0, 0)),
        ),
        compiler_params=pltpu.CompilerParams(
            dimension_semantics=("parallel",)),
    )(a2, b2)

    # Final lane/tile reduction of the tiny partial-moment blocks.
    return jnp.sum(partial[:, :5, :], axis=(0, 2))  # (5,)


# ---------------------------------------------------------------------------
# torchsort.soft_rank (l2 regularization) in plain JAX.
# TODO(synk): the descending sort + PAV isotonic regression is a data-dependent,
# sequential algorithm with no clean Pallas TPU equivalent (and no reverse-mode
# autodiff rule through lax.while_loop); it stays in plain JAX.
# ---------------------------------------------------------------------------
def _isotonic_non_increasing(y):
    """Exact L2 isotonic regression: argmin_{v1>=...>=vn} ||v - y||^2 (PAV)."""
    n = y.shape[0]

    def push(i, state):
        sums, cnts, top = state
        sums = sums.at[top].set(y[i])
        cnts = cnts.at[top].set(1)
        top = top + 1

        def violated(st):
            s, c, t = st
            m_last = s[t - 1] / jnp.maximum(c[t - 1], 1).astype(jnp.float32)
            m_prev = s[t - 2] / jnp.maximum(c[t - 2], 1).astype(jnp.float32)
            return jnp.logical_and(t >= 2, m_last > m_prev)

        def merge(st):
            s, c, t = st
            s = s.at[t - 2].add(s[t - 1])
            c = c.at[t - 2].add(c[t - 1])
            return s, c, t - 1

        return lax.while_loop(violated, merge, (sums, cnts, top))

    sums, cnts, top = lax.fori_loop(
        0, n, push,
        (jnp.zeros((n,), jnp.float32), jnp.zeros((n,), jnp.int32), jnp.int32(0)))

    cnts = jnp.where(jnp.arange(n) < top, cnts, 0)
    means = sums / jnp.maximum(cnts, 1).astype(jnp.float32)
    ends = jnp.cumsum(cnts)                                    # block ends
    idx = jnp.searchsorted(ends, jnp.arange(n), side="right")  # element -> block
    return means[idx]


def _soft_rank_l2(x, regularization_strength=1.0):
    """torchsort.soft_rank(x, 'l2', strength): ascending soft ranks per row."""
    x = x.astype(jnp.float32)
    k = x.shape[-1]
    theta = x / jnp.float32(regularization_strength)
    perm = jnp.argsort(-theta, axis=-1)                  # descending order
    s = jnp.take_along_axis(theta, perm, axis=-1)
    w = jnp.arange(k, 0, -1, dtype=jnp.float32)          # [k, k-1, ..., 1]
    sol = jax.vmap(_isotonic_non_increasing)(s - w[None, :])
    r_sorted = s - sol
    # Scatter the sorted ranks straight back to their original positions
    # (replaces the previous argsort(perm) + gather: saves an O(K log K)
    # sort per row).
    return jax.vmap(lambda p, r: jnp.zeros_like(r).at[p].set(r))(perm, r_sorted)


# ---------------------------------------------------------------------------
# Forward pass of FeatureLoss_Coefficient.
# ---------------------------------------------------------------------------
def feature_loss_coefficient(pred, target, regularization="l2",
                             regularization_strength=1.0):
    if regularization != "l2":
        raise NotImplementedError("only the default 'l2' branch is implemented")
    assert pred.shape == target.shape
    b_, c_, h_, w_ = pred.shape
    k = c_ * h_ * w_
    # F.interpolate(x, size=x.shape[-2:], mode='bilinear') is the identity:
    # the module resizes each level to the last level's own spatial shape and
    # the forward here receives single-tensor lists.
    pred_flat = pred.reshape(b_, k)

    ranks = _soft_rank_l2(pred_flat, regularization_strength)
    # The reference divides the ranks by K before corrcoef; Pearson
    # correlation is invariant to a positive scale on either operand, so the
    # division is dropped (saves a full elementwise HBM read+write pass).

    a = target.reshape(-1)     # corrcoef(target, soft_rank(pred)); kernel upcasts
    b = ranks.reshape(-1)
    sa, sb, saa, sbb, sab = _corr_raw_moments(a, b)
    n = jnp.float32(b_ * k)
    # One-pass raw-moment formula; fine in f32 for rank data / roughly
    # zero-mean feature maps (inputs with a huge DC offset would want a
    # mean-shifted or compensated accumulation).
    cov = sab - sa * sb / n
    var_a = saa - sa * sa / n
    var_b = sbb - sb * sb / n
    corr = cov / jnp.sqrt(var_a * var_b)
    return 1.0 - corr                    # spearman_loss (single pyramid level)


# ---------------------------------------------------------------------------
# Pure-JAX reference (mirrors the PyTorch corrcoef exactly) for self-checking.
# ---------------------------------------------------------------------------
def _reference(pred, target, regularization_strength=1.0):
    b_, c_, h_, w_ = pred.shape
    k = c_ * h_ * w_
    p = _soft_rank_l2(pred.reshape(b_, k), regularization_strength) / k
    t = target.reshape(b_, k).astype(jnp.float32)

    def corrcoef(target_, pred_):
        pred_n = pred_ - pred_.mean()
        target_n = target_ - target_.mean()
        pred_n = pred_n / jnp.linalg.norm(pred_n)
        target_n = target_n / jnp.linalg.norm(target_n)
        return (pred_n * target_n).sum()

    return 1.0 - corrcoef(t, p)


if __name__ == "__main__":
    key = jax.random.PRNGKey(0)
    k1, k2, k3, k4 = jax.random.split(key, 4)
    B, C, H, W = 2, 4, 16, 16
    pred = jax.random.normal(k1, (B, C, H, W), dtype=jnp.float32)
    target = jax.random.normal(k2, (B, C, H, W), dtype=jnp.float32)

    loss = jax.jit(feature_loss_coefficient)(pred, target)
    loss = jax.block_until_ready(loss)

    # Moment-kernel self-checks exercising lane-pad, partial-tile masking and
    # multi-tile + chunked-accumulation paths.
    def _check_moments(n_elems, kk):
        ka, kb = jax.random.split(kk)
        av = jax.random.normal(ka, (n_elems,), jnp.float32)
        bv = jax.random.normal(kb, (n_elems,), jnp.float32)
        got = jax.block_until_ready(jax.jit(_corr_raw_moments)(av, bv))
        want = jnp.stack([av.sum(), bv.sum(), (av * av).sum(),
                          (bv * bv).sum(), (av * bv).sum()])
        atol = 1e-3 * (n_elems ** 0.5) + 1e-3
        assert jnp.allclose(got, want, rtol=1e-3, atol=atol), (n_elems, got, want)

    _check_moments(1000, k3)          # total % 128 != 0  -> lane-pad branch
    _check_moments(10 * 128, k4)      # rows % tm != 0    -> in-kernel row mask
    _check_moments(2048 * 128, k3)    # multi-tile + chunked accumulation

    # soft_rank sanity check (torchsort README example -> exact hard ranks).
    x_test = jnp.array([[8., 0., 5., 3., 2., 1., 6., 7., 9.]], jnp.float32)
    r_test = _soft_rank_l2(x_test, 1.0)
    assert jnp.allclose(
        r_test, jnp.array([[8., 1., 5., 4., 3., 2., 6., 7., 9.]]), atol=1e-3), r_test

    ref = _reference(pred, target)
    assert jnp.allclose(loss, ref, rtol=1e-4, atol=1e-4), (loss, ref)
    print("KERNEL_OK")
</pallas_src>

<mosaic_0001>
module attributes {stable_mosaic.version = 11 : i64} {
  func.func @kernel(%arg0: i32, %arg1: memref<16x128xf32, #tpu.memory_space<vmem>>, %arg2: memref<16x128xf32, #tpu.memory_space<vmem>>, %arg3: memref<1x8x128xf32, #tpu.memory_space<vmem>>) attributes {dimension_semantics = [#tpu.dimension_semantics<parallel>], iteration_bounds = array<i64: 1>, scalar_prefetch = 0 : i64, scratch_operands = 0 : i64, tpu.core_type = #tpu.core_type<tc>, window_params = [{transform_indices = @transform_0, window_bounds = array<i64: 16, 128>}, {transform_indices = @transform_1, window_bounds = array<i64: 16, 128>}, {transform_indices = @transform_2, window_bounds = array<i64: 1, 8, 128>}]} {
    %cst = arith.constant 0.000000e+00 : f32
    %0 = vector.broadcast %cst : f32 to vector<1x128xf32>
    %c0_i32 = arith.constant 0 : i32
    %c16_i32 = arith.constant 16 : i32
    %1 = arith.muli %c0_i32, %c16_i32 : i32
    %2 = tpu.assume_multiple %1, 16 : i32
    %3 = arith.index_cast %2 : i32 to index
    %c0 = arith.constant 0 : index
    %4 = vector.load %arg1[%3, %c0] : memref<16x128xf32, #tpu.memory_space<vmem>>, vector<16x128xf32>
    %5 = arith.index_cast %2 : i32 to index
    %c0_0 = arith.constant 0 : index
    %6 = vector.load %arg2[%5, %c0_0] : memref<16x128xf32, #tpu.memory_space<vmem>>, vector<16x128xf32>
    %cst_1 = arith.constant dense<0.000000e+00> : vector<128xf32>
    %7 = vector.multi_reduction <add>, %4, %cst_1 [0] : vector<16x128xf32> to vector<128xf32>
    %8 = vector.shape_cast %7 : vector<128xf32> to vector<1x128xf32>
    %9 = arith.addf %0, %8 : vector<1x128xf32>
    %cst_2 = arith.constant dense<0.000000e+00> : vector<128xf32>
    %10 = vector.multi_reduction <add>, %6, %cst_2 [0] : vector<16x128xf32> to vector<128xf32>
    %11 = vector.shape_cast %10 : vector<128xf32> to vector<1x128xf32>
    %12 = arith.addf %0, %11 : vector<1x128xf32>
    %13 = arith.mulf %4, %4 : vector<16x128xf32>
    %cst_3 = arith.constant dense<0.000000e+00> : vector<128xf32>
    %14 = vector.multi_reduction <add>, %13, %cst_3 [0] : vector<16x128xf32> to vector<128xf32>
    %15 = vector.shape_cast %14 : vector<128xf32> to vector<1x128xf32>
    %16 = arith.addf %0, %15 : vector<1x128xf32>
    %17 = arith.mulf %6, %6 : vector<16x128xf32>
    %cst_4 = arith.constant dense<0.000000e+00> : vector<128xf32>
    %18 = vector.multi_reduction <add>, %17, %cst_4 [0] : vector<16x128xf32> to vector<128xf32>
    %19 = vector.shape_cast %18 : vector<128xf32> to vector<1x128xf32>
    %20 = arith.addf %0, %19 : vector<1x128xf32>
    %21 = arith.mulf %4, %6 : vector<16x128xf32>
    %cst_5 = arith.constant dense<0.000000e+00> : vector<128xf32>
    %22 = vector.multi_reduction <add>, %21, %cst_5 [0] : vector<16x128xf32> to vector<128xf32>
    %23 = vector.shape_cast %22 : vector<128xf32> to vector<1x128xf32>
    %24 = arith.addf %0, %23 : vector<1x128xf32>
    %c1_i32 = arith.constant 1 : i32
    %c0_6 = arith.constant 0 : index
    %c0_7 = arith.constant 0 : index
    %c0_8 = arith.constant 0 : index
    %25 = vector.load %arg3[%c0_6, %c0_7, %c0_8] : memref<1x8x128xf32, #tpu.memory_space<vmem>>, vector<1x1x128xf32>
    %26 = vector.shape_cast %25 : vector<1x1x128xf32> to vector<1x128xf32>
    %27 = vector.shape_cast %9 : vector<1x128xf32> to vector<1x1x128xf32>
    tpu.vector_store %arg3[%c0_6, %c0_7, %c0_8], %27 {strides = array<i32>} : memref<1x8x128xf32, #tpu.memory_space<vmem>>, vector<1x1x128xf32>,
    %c0_9 = arith.constant 0 : index
    %c1 = arith.constant 1 : index
    %c0_10 = arith.constant 0 : index
    %28 = vector.load %arg3[%c0_9, %c1, %c0_10] : memref<1x8x128xf32, #tpu.memory_space<vmem>>, vector<1x1x128xf32>
    %29 = vector.shape_cast %28 : vector<1x1x128xf32> to vector<1x128xf32>
    %30 = vector.shape_cast %12 : vector<1x128xf32> to vector<1x1x128xf32>
    tpu.vector_store %arg3[%c0_9, %c1, %c0_10], %30 {strides = array<i32>} : memref<1x8x128xf32, #tpu.memory_space<vmem>>, vector<1x1x128xf32>,
    %c0_11 = arith.constant 0 : index
    %c2 = arith.constant 2 : index
    %c0_12 = arith.constant 0 : index
    %31 = vector.load %arg3[%c0_11, %c2, %c0_12] : memref<1x8x128xf32, #tpu.memory_space<vmem>>, vector<1x1x128xf32>
    %32 = vector.shape_cast %31 : vector<1x1x128xf32> to vector<1x128xf32>
    %33 = vector.shape_cast %16 : vector<1x128xf32> to vector<1x1x128xf32>
    tpu.vector_store %arg3[%c0_11, %c2, %c0_12], %33 {strides = array<i32>} : memref<1x8x128xf32, #tpu.memory_space<vmem>>, vector<1x1x128xf32>,
    %c0_13 = arith.constant 0 : index
    %c3 = arith.constant 3 : index
    %c0_14 = arith.constant 0 : index
    %34 = vector.load %arg3[%c0_13, %c3, %c0_14] : memref<1x8x128xf32, #tpu.memory_space<vmem>>, vector<1x1x128xf32>
    %35 = vector.shape_cast %34 : vector<1x1x128xf32> to vector<1x128xf32>
    %36 = vector.shape_cast %20 : vector<1x128xf32> to vector<1x1x128xf32>
    tpu.vector_store %arg3[%c0_13, %c3, %c0_14], %36 {strides = array<i32>} : memref<1x8x128xf32, #tpu.memory_space<vmem>>, vector<1x1x128xf32>,
    %c0_15 = arith.constant 0 : index
    %c4 = arith.constant 4 : index
    %c0_16 = arith.constant 0 : index
    %37 = vector.load %arg3[%c0_15, %c4, %c0_16] : memref<1x8x128xf32, #tpu.memory_space<vmem>>, vector<1x1x128xf32>
    %38 = vector.shape_cast %37 : vector<1x1x128xf32> to vector<1x128xf32>
    %39 = vector.shape_cast %24 : vector<1x128xf32> to vector<1x1x128xf32>
    tpu.vector_store %arg3[%c0_15, %c4, %c0_16], %39 {strides = array<i32>} : memref<1x8x128xf32, #tpu.memory_space<vmem>>, vector<1x1x128xf32>,
    return
  }
  func.func @transform_0(%arg0: i32) -> (i32, i32) {
    %c0_i32 = arith.constant 0 : i32
    %c0_i32_0 = arith.constant 0 : i32
    return %arg0, %c0_i32 : i32, i32
  }
  func.func @transform_1(%arg0: i32) -> (i32, i32) {
    %c0_i32 = arith.constant 0 : i32
    %c0_i32_0 = arith.constant 0 : i32
    return %arg0, %c0_i32 : i32, i32
  }
  func.func @transform_2(%arg0: i32) -> (i32, i32, i32) {
    %c0_i32 = arith.constant 0 : i32
    %c0_i32_0 = arith.constant 0 : i32
    %c0_i32_1 = arith.constant 0 : i32
    return %arg0, %c0_i32, %c0_i32_0 : i32, i32, i32
  }
}

</mosaic_0001>

<llo_original>
// kernel: neg.1
$region0: #{neg.1}
  #allocation0 [shape = 's32[1]{0}', space=sflag, size = 0x4, scoped, tag = 'scoped memory for neg.1']
  %s0 = inlined_call_operand.vmem [shape: f32[2,1024], index: 0, kind: input, shape index: {}]
  %s1 = inlined_call_operand.vmem [shape: f32[2,1024], index: 1, kind: output, shape index: {}]
  %v2 = vld [vmem:[%s0] sm:$0x3]
  %3 = xla_tuple %v2
  %4 = xla_tuple %3
  %v5 = vxor.u32 %v2, 2147483648
  %6 = xla_tuple %v5
  %7 = vst [vmem:[%s1] sm:$0x3] %v5
  %s8 = scalar_lea.vmem %s0, 2
  %v9 = vld [vmem:[%s8] sm:$0x3]
  %10 = xla_tuple %v9
  %11 = xla_tuple %10
  %v12 = vxor.u32 %v9, 2147483648
  %13 = xla_tuple %v12
  %s14 = scalar_lea.vmem %s1, 2
  %15 = vst [vmem:[%s14] sm:$0x3] %v12
  %s16 = scalar_lea.vmem %s0, 4
  %v17 = vld [vmem:[%s16] sm:$0x3]
  %18 = xla_tuple %v17
  %19 = xla_tuple %18
  %v20 = vxor.u32 %v17, 2147483648
  %21 = xla_tuple %v20
  %s22 = scalar_lea.vmem %s1, 4
  %23 = vst [vmem:[%s22] sm:$0x3] %v20
  %s24 = scalar_lea.vmem %s0, 6
  %v25 = vld [vmem:[%s24] sm:$0x3]
  %26 = xla_tuple %v25
  %27 = xla_tuple %26
  %v28 = vxor.u32 %v25, 2147483648
  %29 = xla_tuple %v28
  %s30 = scalar_lea.vmem %s1, 6
  %31 = vst [vmem:[%s30] sm:$0x3] %v28
  %s32 = scalar_lea.vmem %s0, 8
  %v33 = vld [vmem:[%s32] sm:$0x3]
  %34 = xla_tuple %v33
  %35 = xla_tuple %34
  %v36 = vxor.u32 %v33, 2147483648
  %37 = xla_tuple %v36
  %s38 = scalar_lea.vmem %s1, 8
  %39 = vst [vmem:[%s38] sm:$0x3] %v36
  %s40 = scalar_lea.vmem %s0, 10
  %v41 = vld [vmem:[%s40] sm:$0x3]
  %42 = xla_tuple %v41
  %43 = xla_tuple %42
  %v44 = vxor.u32 %v41, 2147483648
  %45 = xla_tuple %v44
  %s46 = scalar_lea.vmem %s1, 10
  %47 = vst [vmem:[%s46] sm:$0x3] %v44
  %s48 = scalar_lea.vmem %s0, 12
  %v49 = vld [vmem:[%s48] sm:$0x3]
  %50 = xla_tuple %v49
  %51 = xla_tuple %50
  %v52 = vxor.u32 %v49, 2147483648
  %53 = xla_tuple %v52
  %s54 = scalar_lea.vmem %s1, 12
  %55 = vst [vmem:[%s54] sm:$0x3] %v52
  %s56 = scalar_lea.vmem %s0, 14
  %v57 = vld [vmem:[%s56] sm:$0x3]
  %58 = xla_tuple %v57
  %59 = xla_tuple %58
  %v60 = vxor.u32 %v57, 2147483648
  %61 = xla_tuple %v60
  %s62 = scalar_lea.vmem %s1, 14
  %63 = vst [vmem:[%s62] sm:$0x3] %v60

// kernel: custom-call.30
$region0: #{custom-call.30}
  %s0 = inlined_call_operand.vmem [shape: u32[2,1024], index: 0, kind: output, shape index: {}]

// kernel: squeeze.22
$region0: #{squeeze.22}
  %s0 = inlined_call_operand.vmem [shape: s32[2048], index: 0, kind: input, shape index: {}]
  %s1 = inlined_call_operand.vmem [shape: s32[2,1024], index: 1, kind: output, shape index: {}]
  $region1: #{squeeze.22} parent=0
    #allocation0 [shape = 'u8[32768]{0}', space=vmem, size = 0x8000, scoped, tag = 'scoped mem for output reshape']
    %v2 = vld [vmem:[%s0] sm:$0xff]
    %3 = vst [vmem:[#allocation0] ss:$8 sm:$0xf] %v2
    %4 = vst [vmem:[#allocation0] ss:$8 sm:$0xf0] %v2
    %s5 = scalar_lea.vmem %s0, 8
    %v6 = vld [vmem:[%s5] sm:$0xff]
    %s7 = scalar_lea.vmem [#allocation0], 1
    %8 = vst [vmem:[%s7] ss:$8 sm:$0xf] %v6
    %s9 = scalar_lea.vmem [#allocation0], 1
    %10 = vst [vmem:[%s9] ss:$8 sm:$0xf0] %v6
    %s12 = sshll.u32 1, 2
    %s13 = ssub.s32 %s12, 1
    %v15 = vld [vmem:[#allocation0] sm:%s13]
    %s16 = sshll.u32 1, 2
    %s17 = ssub.s32 %s16, 1
    %18 = vst [vmem:[%s1] sm:%s17] %v15
    %s19 = scalar_lea.vmem [#allocation0], 8
    %v20 = vld [vmem:[%s19] sm:%s13]
    %s21 = sshll.u32 1, 2
    %s22 = ssub.s32 %s21, 1
    %s23 = scalar_lea.vmem %s1, 2
    %24 = vst [vmem:[%s23] sm:%s22] %v20
    %s25 = scalar_lea.vmem [#allocation0], 16
    %v26 = vld [vmem:[%s25] sm:%s13]
    %s27 = sshll.u32 1, 2
    %s28 = ssub.s32 %s27, 1
    %s29 = smul.addr 2, 2
    %s30 = scalar_lea.vmem %s1, %s29
    %31 = vst [vmem:[%s30] sm:%s28] %v26
    %s32 = scalar_lea.vmem [#allocation0], 24
    %v33 = vld [vmem:[%s32] sm:%s13]
    %s34 = sshll.u32 1, 2
    %s35 = ssub.s32 %s34, 1
    %s36 = smul.addr 2, 3
    %s37 = scalar_lea.vmem %s1, %s36
    %38 = vst [vmem:[%s37] sm:%s35] %v33
    %s39 = scalar_lea.vmem [#allocation0], 32
    %v40 = vld [vmem:[%s39] sm:%s13]
    %s41 = sshll.u32 1, 2
    %s42 = ssub.s32 %s41, 1
    %s43 = smul.addr 2, 4
    %s44 = scalar_lea.vmem %s1, %s43
    %45 = vst [vmem:[%s44] sm:%s42] %v40
    %s46 = scalar_lea.vmem [#allocation0], 40
    %v47 = vld [vmem:[%s46] sm:%s13]
    %s48 = sshll.u32 1, 2
    %s49 = ssub.s32 %s48, 1
    %s50 = smul.addr 2, 5
    %s51 = scalar_lea.vmem %s1, %s50
    %52 = vst [vmem:[%s51] sm:%s49] %v47
    %s53 = scalar_lea.vmem [#allocation0], 48
    %v54 = vld [vmem:[%s53] sm:%s13]
    %s55 = sshll.u32 1, 2
    %s56 = ssub.s32 %s55, 1
    %s57 = smul.addr 2, 6
    %s58 = scalar_lea.vmem %s1, %s57
    %59 = vst [vmem:[%s58] sm:%s56] %v54
    %s60 = scalar_lea.vmem [#allocation0], 56
    %v61 = vld [vmem:[%s60] sm:%s13]
    %s62 = sshll.u32 1, 2
    %s63 = ssub.s32 %s62, 1
    %s64 = smul.addr 2, 7
    %s65 = scalar_lea.vmem %s1, %s64
    %66 = vst [vmem:[%s65] sm:%s63] %v61

// kernel: feature_loss_coefficient.1
$region0: #{feature_loss_coefficient.1}
  #allocation0 [shape = 'u32[]', space=smem, size = 0x4, offset = 0x4, fixed_abs, tag = 'smem constant byte address 0x4 - core index']
  #allocation1 [shape = 'u32[144,128]{1,0:T(1,128)}', space=vmem, size = 0x12000, scoped, tag = 'internal scratch']
  %s0 = inlined_call_operand.vmem [shape: f32[16,128], index: 0, kind: input, shape index: {}]
  %s1 = inlined_call_operand.vmem [shape: f32[16,128], index: 1, kind: input, shape index: {}]
  %s2 = inlined_call_operand.vmem [shape: f32[1,8,128], index: 2, kind: output, shape index: {}]
  %s3 = sld [smem:[#allocation0]]
  $region18: #{feature_loss_coefficient.1} parent=0
    _
  %s5 = ssub.s32 1, %s3
  %s6 = scalar_select 0, %s5, %s3
  // Predicated region
  $region2: #{feature_loss_coefficient.1} parent=0 // pred_check
    _
  $region3: #{feature_loss_coefficient.1} parent=0 // pred_check_branch
    %8 = sbr.rel (0) target = $region5
  $region4: #{feature_loss_coefficient.1} parent=0 // pred_region
    _
  $region5: #{feature_loss_coefficient.1} parent=0 // pred_fallthru
    _
  // Predicated region
  $region6: #{feature_loss_coefficient.1} parent=0 // pred_check
    _
  $region7: #{feature_loss_coefficient.1} parent=0 // pred_check_branch
    %10 = sbr.rel (0) target = $region9
  $region8: #{feature_loss_coefficient.1} parent=0 // pred_region
    _
  $region9: #{feature_loss_coefficient.1} parent=0 // pred_fallthru
    _
  %v11 = vld [vmem:[%s0] sm:$0xff]
  %v12 = vld [vmem:[%s0 + $0x8] sm:$0xff]
  %v13 = vld [vmem:[%s1] sm:$0xff]
  %v14 = vld [vmem:[%s1 + $0x8] sm:$0xff]
  %v15 = vadd.f32 %v11, %v12
  %v16 = vrot.slane %v15, 4
  %v17 = vadd.f32 %v15, %v16
  %v18 = vrot.slane %v17, 2
  %v19 = vadd.f32 %v17, %v18
  %v20 = vrot.slane %v19, 1
  %v21 = vadd.f32 %v19, %v20
  %v22 = vadd.f32 %v21, 0.0
  %v23 = vadd.f32 %v13, %v14
  %v24 = vrot.slane %v23, 4
  %v25 = vadd.f32 %v23, %v24
  %v26 = vrot.slane %v25, 2
  %v27 = vadd.f32 %v25, %v26
  %v28 = vrot.slane %v27, 1
  %v29 = vadd.f32 %v27, %v28
  %v30 = vadd.f32 %v29, 0.0
  %v31 = vmul.f32 %v11, %v11
  %v32 = vmul.f32 %v12, %v12
  %v33 = vadd.f32 %v31, %v32
  %v34 = vrot.slane %v33, 4
  %v35 = vadd.f32 %v33, %v34
  %v36 = vrot.slane %v35, 2
  %v37 = vadd.f32 %v35, %v36
  %v38 = vrot.slane %v37, 1
  %v39 = vadd.f32 %v37, %v38
  %v40 = vadd.f32 %v39, 0.0
  %v41 = vmul.f32 %v13, %v13
  %v42 = vmul.f32 %v14, %v14
  %v43 = vadd.f32 %v41, %v42
  %v44 = vrot.slane %v43, 4
  %v45 = vadd.f32 %v43, %v44
  %v46 = vrot.slane %v45, 2
  %v47 = vadd.f32 %v45, %v46
  %v48 = vrot.slane %v47, 1
  %v49 = vadd.f32 %v47, %v48
  %v50 = vadd.f32 %v49, 0.0
  %v51 = vmul.f32 %v11, %v13
  %v52 = vmul.f32 %v12, %v14
  %v53 = vadd.f32 %v51, %v52
  %v54 = vrot.slane %v53, 4
  %v55 = vadd.f32 %v53, %v54
  %v56 = vrot.slane %v55, 2
  %v57 = vadd.f32 %v55, %v56
  %v58 = vrot.slane %v57, 1
  %v59 = vadd.f32 %v57, %v58
  %v60 = vadd.f32 %v59, 0.0
  %61 = vst [vmem:[%s2] sm:$0x1] %v22
  %62 = vst [vmem:[%s2 + $0x1] sm:$0x1] %v30
  %63 = vst [vmem:[%s2 + $0x2] sm:$0x1] %v40
  %64 = vst [vmem:[%s2 + $0x3] sm:$0x1] %v50
  %65 = vst [vmem:[%s2 + $0x4] sm:$0x1] %v60
  // Predicated region
  $region10: #{feature_loss_coefficient.1} parent=0 // pred_check
    _
  $region11: #{feature_loss_coefficient.1} parent=0 // pred_check_branch
    %67 = sbr.rel (0) target = $region13
  $region12: #{feature_loss_coefficient.1} parent=0 // pred_region
    _
  $region13: #{feature_loss_coefficient.1} parent=0 // pred_fallthru
    _
  // Predicated region
  $region14: #{feature_loss_coefficient.1} parent=0 // pred_check
    _
  $region15: #{feature_loss_coefficient.1} parent=0 // pred_check_branch
    %69 = sbr.rel (0) target = $region17
  $region16: #{feature_loss_coefficient.1} parent=0 // pred_region
    _
  $region17: #{feature_loss_coefficient.1} parent=0 // pred_fallthru
    _

</llo_original>
